<compile_context>
chip_gen: v6e
topology: v6e:2x2x1
jax: 0.10.0
libtpu: 0.0.40
codegen_flags: <defaults>
</compile_context>

<pallas_src>
import jax
import jax.numpy as jnp
from jax.experimental import pallas as pl
from jax.experimental.pallas import tpu as pltpu


def _reduce_state_kernel(h_ref, c_ref, w_ref, b_ref, o_ref):
    # h_ref, c_ref: (2, B, H)   raw LSTM states (transpose folded in here)
    # w_ref:        (4H, 2H)    block-diagonal packed weights
    # b_ref:        (1, 2H)     concatenated bias
    # o_ref:        (B, 2H)     [relu(h_in @ Wh + bh) | relu(c_in @ Wc + bc)]
    x = jnp.concatenate(
        [h_ref[0], h_ref[1], c_ref[0], c_ref[1]], axis=-1
    )  # (B, 4H) -- lane-dense (128 lanes for H=32)
    acc = jnp.dot(x, w_ref[...], preferred_element_type=jnp.float32)
    acc = acc + b_ref[...]
    o_ref[...] = jnp.maximum(acc, 0.0).astype(o_ref.dtype)


def fused_reduce_state(h, c, w_bd, b_cat):
    """Single-launch fused ReduceState: returns (B, 2H) slab = [h_red | c_red]."""
    ndir, B, H = h.shape
    Kin, Nout = w_bd.shape          # (4H, 2H)
    assert ndir == 2 and Kin == 4 * H and Nout == 2 * H
    assert b_cat.shape == (1, Nout)

    itemsize = jnp.dtype(h.dtype).itemsize
    cost = pl.CostEstimate(
        flops=2 * B * Kin * Nout,
        transcendentals=0,
        bytes_accessed=itemsize * (h.size + c.size + w_bd.size + b_cat.size
                                   + B * Nout),
    )

    vmem = pl.BlockSpec(memory_space=pltpu.MemorySpace.VMEM)
    return pl.pallas_call(
        _reduce_state_kernel,
        out_shape=jax.ShapeDtypeStruct((B, Nout), h.dtype),
        in_specs=[vmem, vmem, vmem, vmem],
        out_specs=vmem,
        cost_estimate=cost,
    )(h, c, w_bd, b_cat)


class ReduceStateParams:
    """Deterministic synthetic parameters matching nn.Linear(2H, H) x 2."""

    def __init__(self, key, hidden_dim, std=1e-4, dtype=jnp.float32):
        k1, k2, k3, k4 = jax.random.split(key, 4)
        H = hidden_dim
        # Stored as (in, out) = (2H, H), i.e. PyTorch Linear weight transposed,
        # so the kernel hot path is a plain x @ W matmul on the MXU.
        self.w_h = (std * jax.random.normal(k1, (2 * H, H))).astype(dtype)
        self.b_h = (std * jax.random.normal(k2, (H,))).astype(dtype)
        self.w_c = (std * jax.random.normal(k3, (2 * H, H))).astype(dtype)
        self.b_c = (std * jax.random.normal(k4, (H,))).astype(dtype)
        self.hidden_dim = H

        # Pre-pack once: block-diagonal weight (4H, 2H) and concatenated bias.
        w_bd = jnp.zeros((4 * H, 2 * H), dtype)
        w_bd = w_bd.at[: 2 * H, :H].set(self.w_h)
        w_bd = w_bd.at[2 * H :, H:].set(self.w_c)
        self.w_bd = w_bd
        self.b_cat = jnp.concatenate([self.b_h, self.b_c]).reshape(1, 2 * H)


@jax.jit
def _reduce_state_forward_arrays(w_bd, b_cat, h, c):
    H = w_bd.shape[1] // 2
    out = fused_reduce_state(h, c, w_bd, b_cat)        # (B, 2H)
    # glue: split the fused slab and unsqueeze(0); fused/cheap under jit.
    return out[None, :, :H], out[None, :, H:]


def reduce_state_forward(params, hidden):
    """hidden = (h, c), each (2, batch, hidden_dim).
    Returns (h_red, c_red), each (1, batch, hidden_dim)."""
    h, c = hidden
    num_dir, batch, hdim = h.shape
    assert num_dir == 2 and hdim == params.hidden_dim
    return _reduce_state_forward_arrays(params.w_bd, params.b_cat, h, c)


def _reference(params, hidden):
    h, c = hidden
    batch = h.shape[1]
    hdim = params.hidden_dim
    h_in = jnp.transpose(h, (1, 0, 2)).reshape(batch, 2 * hdim)
    c_in = jnp.transpose(c, (1, 0, 2)).reshape(batch, 2 * hdim)
    h_ref = jnp.maximum(h_in @ params.w_h + params.b_h, 0.0)
    c_ref = jnp.maximum(c_in @ params.w_c + params.b_c, 0.0)
    return h_ref[None], c_ref[None]


if __name__ == "__main__":
    hidden_dim = 32
    batch = 8

    key = jax.random.PRNGKey(0)
    kp, kh, kc = jax.random.split(key, 3)

    params = ReduceStateParams(kp, hidden_dim)
    h = jax.random.normal(kh, (2, batch, hidden_dim), dtype=jnp.float32)
    c = jax.random.normal(kc, (2, batch, hidden_dim), dtype=jnp.float32)

    out_h, out_c = reduce_state_forward(params, (h, c))
    jax.block_until_ready(out_h)
    jax.block_until_ready(out_c)

    ref_h, ref_c = _reference(params, (h, c))
    assert out_h.shape == (1, batch, hidden_dim)
    assert out_c.shape == (1, batch, hidden_dim)
    assert jnp.allclose(out_h, ref_h, atol=1e-5, rtol=1e-5)
    assert jnp.allclose(out_c, ref_c, atol=1e-5, rtol=1e-5)

    print("KERNEL_OK")
</pallas_src>

<mosaic_0001>
module attributes {stable_mosaic.version = 11 : i64} {
  func.func @_reduce_state_kernel(%arg0: memref<2x8x32xf32, #tpu.memory_space<vmem>>, %arg1: memref<2x8x32xf32, #tpu.memory_space<vmem>>, %arg2: memref<128x64xf32, #tpu.memory_space<vmem>>, %arg3: memref<1x64xf32, #tpu.memory_space<vmem>>, %arg4: memref<8x64xf32, #tpu.memory_space<vmem>>) attributes {dimension_semantics = [], scalar_prefetch = 0 : i64, scratch_operands = 0 : i64, tpu.core_type = #tpu.core_type<tc>} {
    %c0 = arith.constant 0 : index
    %c0_0 = arith.constant 0 : index
    %c0_1 = arith.constant 0 : index
    %0 = vector.load %arg0[%c0, %c0_0, %c0_1] : memref<2x8x32xf32, #tpu.memory_space<vmem>>, vector<1x8x32xf32>
    %1 = vector.shape_cast %0 : vector<1x8x32xf32> to vector<8x32xf32>
    %c1 = arith.constant 1 : index
    %c0_2 = arith.constant 0 : index
    %c0_3 = arith.constant 0 : index
    %2 = vector.load %arg0[%c1, %c0_2, %c0_3] : memref<2x8x32xf32, #tpu.memory_space<vmem>>, vector<1x8x32xf32>
    %3 = vector.shape_cast %2 : vector<1x8x32xf32> to vector<8x32xf32>
    %c0_4 = arith.constant 0 : index
    %c0_5 = arith.constant 0 : index
    %c0_6 = arith.constant 0 : index
    %4 = vector.load %arg1[%c0_4, %c0_5, %c0_6] : memref<2x8x32xf32, #tpu.memory_space<vmem>>, vector<1x8x32xf32>
    %5 = vector.shape_cast %4 : vector<1x8x32xf32> to vector<8x32xf32>
    %c1_7 = arith.constant 1 : index
    %c0_8 = arith.constant 0 : index
    %c0_9 = arith.constant 0 : index
    %6 = vector.load %arg1[%c1_7, %c0_8, %c0_9] : memref<2x8x32xf32, #tpu.memory_space<vmem>>, vector<1x8x32xf32>
    %7 = vector.shape_cast %6 : vector<1x8x32xf32> to vector<8x32xf32>
    %8 = tpu.concatenate %1, %3, %5, %7 in 1 : vector<8x32xf32>, vector<8x32xf32>, vector<8x32xf32>, vector<8x32xf32> -> vector<8x128xf32>
    %c0_10 = arith.constant 0 : index
    %c0_11 = arith.constant 0 : index
    %9 = vector.load %arg2[%c0_10, %c0_11] : memref<128x64xf32, #tpu.memory_space<vmem>>, vector<128x64xf32>
    %cst = arith.constant dense<0.000000e+00> : vector<8x64xf32>
    %10 = tpu.matmul %8, %9, %cst {dimension_numbers = #tpu.dot_dimension_numbers<[1], [0], [0], [1], [0, 0, 1, 1], [], []>} : vector<8x128xf32>, vector<128x64xf32>, vector<8x64xf32> -> vector<8x64xf32>
    %c0_12 = arith.constant 0 : index
    %c0_13 = arith.constant 0 : index
    %11 = vector.load %arg3[%c0_12, %c0_13] : memref<1x64xf32, #tpu.memory_space<vmem>>, vector<1x64xf32>
    %12 = vector.broadcast %11 : vector<1x64xf32> to vector<8x64xf32>
    %13 = arith.addf %10, %12 : vector<8x64xf32>
    %cst_14 = arith.constant 0.000000e+00 : f32
    %14 = vector.broadcast %cst_14 : f32 to vector<8x64xf32>
    %15 = arith.maximumf %13, %14 : vector<8x64xf32>
    %c0_15 = arith.constant 0 : index
    %c0_16 = arith.constant 0 : index
    %16 = vector.load %arg4[%c0_15, %c0_16] : memref<8x64xf32, #tpu.memory_space<vmem>>, vector<8x64xf32>
    tpu.vector_store %arg4[%c0_15, %c0_16], %15 {strides = array<i32>} : memref<8x64xf32, #tpu.memory_space<vmem>>, vector<8x64xf32>,
    return
  }
}

</mosaic_0001>

<llo_original>
// kernel: _reduce_state_forward_arrays.1
$region0: #{_reduce_state_forward_arrays.1}
  #allocation0 [shape = 'u32[]', space=smem, size = 0x4, offset = 0x4, fixed_abs, tag = 'smem constant byte address 0x4 - core index']
  #allocation1 [shape = 'u32[144,128]{1,0:T(1,128)}', space=vmem, size = 0x12000, scoped, tag = 'internal scratch']
  %s0 = inlined_call_operand.vmem [shape: f32[2,8,32], index: 0, kind: input, shape index: {}]
  %s1 = inlined_call_operand.vmem [shape: f32[2,8,32], index: 1, kind: input, shape index: {}]
  %s2 = inlined_call_operand.vmem [shape: f32[128,64], index: 2, kind: input, shape index: {}]
  %s3 = inlined_call_operand.vmem [shape: f32[1,64], index: 3, kind: input, shape index: {}]
  %s4 = inlined_call_operand.vmem [shape: f32[8,64], index: 4, kind: output, shape index: {}]
  %s5 = sld [smem:[#allocation0]]
  $region26: #{_reduce_state_forward_arrays.1} parent=0
    _
  %s7 = ssub.s32 1, %s5
  %s8 = scalar_select 0, %s7, %s5
  // Predicated region
  $region2: #{_reduce_state_forward_arrays.1} parent=0 // pred_check
    _
  $region3: #{_reduce_state_forward_arrays.1} parent=0 // pred_check_branch
    %10 = sbr.rel (0) target = $region5
  $region4: #{_reduce_state_forward_arrays.1} parent=0 // pred_region
    _
  $region5: #{_reduce_state_forward_arrays.1} parent=0 // pred_fallthru
    _
  // Predicated region
  $region6: #{_reduce_state_forward_arrays.1} parent=0 // pred_check
    _
  $region7: #{_reduce_state_forward_arrays.1} parent=0 // pred_check_branch
    %12 = sbr.rel (0) target = $region9
  $region8: #{_reduce_state_forward_arrays.1} parent=0 // pred_region
    _
  $region9: #{_reduce_state_forward_arrays.1} parent=0 // pred_fallthru
    _
  // Predicated region
  $region10: #{_reduce_state_forward_arrays.1} parent=0 // pred_check
    _
  $region11: #{_reduce_state_forward_arrays.1} parent=0 // pred_check_branch
    %14 = sbr.rel (0) target = $region13
  $region12: #{_reduce_state_forward_arrays.1} parent=0 // pred_region
    _
  $region13: #{_reduce_state_forward_arrays.1} parent=0 // pred_fallthru
    _
  // Predicated region
  $region14: #{_reduce_state_forward_arrays.1} parent=0 // pred_check
    _
  $region15: #{_reduce_state_forward_arrays.1} parent=0 // pred_check_branch
    %16 = sbr.rel (0) target = $region17
  $region16: #{_reduce_state_forward_arrays.1} parent=0 // pred_region
    _
  $region17: #{_reduce_state_forward_arrays.1} parent=0 // pred_fallthru
    _
  %v17 = vld [vmem:[%s0] sm:$0xff]
  %s18 = scalar_lea.vmem %s0, 8
  %v19 = vld [vmem:[%s18] sm:$0xff]
  %v20 = vld [vmem:[%s1] sm:$0xff]
  %s21 = scalar_lea.vmem %s1, 8
  %v22 = vld [vmem:[%s21] sm:$0xff]
  %24 = vrot.lane.b32.xlu0 %v19, 32
  %v25 = vpop.permute.xlu0 %24
  %28 = vrot.lane.b32.xlu0 %v20, 64
  %v29 = vpop.permute.xlu0 %28
  %32 = vrot.lane.b32.xlu0 %v22, 96
  %v33 = vpop.permute.xlu0 %32
  %vm35 = vcmask 261120
  %v36 = vsel %vm35, %v17, %v25
  %vm37 = vcmask 523264
  %v38 = vsel %vm37, %v36, %v29
  %vm39 = vcmask 785408
  %v40 = vsel %vm39, %v38, %v33
  %v41 = vld [vmem:[%s2] sm:$0xff]
  %v42 = vld [vmem:[%s2 + $0x8] sm:$0xff]
  %v43 = vld [vmem:[%s2 + $0x10] sm:$0xff]
  %v44 = vld [vmem:[%s2 + $0x18] sm:$0xff]
  %v45 = vld [vmem:[%s2 + $0x20] sm:$0xff]
  %v46 = vld [vmem:[%s2 + $0x28] sm:$0xff]
  %v47 = vld [vmem:[%s2 + $0x30] sm:$0xff]
  %v48 = vld [vmem:[%s2 + $0x38] sm:$0xff]
  %v49 = vld [vmem:[%s2 + $0x40] sm:$0xff]
  %v50 = vld [vmem:[%s2 + $0x48] sm:$0xff]
  %v51 = vld [vmem:[%s2 + $0x50] sm:$0xff]
  %v52 = vld [vmem:[%s2 + $0x58] sm:$0xff]
  %v53 = vld [vmem:[%s2 + $0x60] sm:$0xff]
  %v54 = vld [vmem:[%s2 + $0x68] sm:$0xff]
  %v55 = vld [vmem:[%s2 + $0x70] sm:$0xff]
  %v56 = vld [vmem:[%s2 + $0x78] sm:$0xff]
  %v57 = vld [vmem:[%s3] sm:$0x1]
  %v59 = vlaneseq
  %v60 = vshrl.u32 %v59, 7
  %v61 = vsub.s32 0, %v60
  %v62 = vrot.slane %v57, %v61
  %64 = vmatprep.subr.mxu0 0.0
  %65 = vmatpush1.msra.mxu0 %v56
  %66 = vmatprep.subr.mxu0 0.0
  %67 = vmatpush1.msra.mxu0 %v55
  %68 = vmatprep.subr.mxu0 0.0
  %69 = vmatpush1.msra.mxu0 %v54
  %70 = vmatprep.subr.mxu0 0.0
  %71 = vmatpush1.msra.mxu0 %v53
  %72 = vmatprep.subr.mxu0 0.0
  %73 = vmatpush1.msra.mxu0 %v52
  %74 = vmatprep.subr.mxu0 0.0
  %75 = vmatpush1.msra.mxu0 %v51
  %76 = vmatprep.subr.mxu0 0.0
  %77 = vmatpush1.msra.mxu0 %v50
  %78 = vmatprep.subr.mxu0 0.0
  %79 = vmatpush1.msra.mxu0 %v49
  %80 = vmatprep.subr.mxu0 0.0
  %81 = vmatpush1.msra.mxu0 %v48
  %82 = vmatprep.subr.mxu0 0.0
  %83 = vmatpush1.msra.mxu0 %v47
  %84 = vmatprep.subr.mxu0 0.0
  %85 = vmatpush1.msra.mxu0 %v46
  %86 = vmatprep.subr.mxu0 0.0
  %87 = vmatpush1.msra.mxu0 %v45
  %88 = vmatprep.subr.mxu0 0.0
  %89 = vmatpush1.msra.mxu0 %v44
  %90 = vmatprep.subr.mxu0 0.0
  %91 = vmatpush1.msra.mxu0 %v43
  %92 = vmatprep.subr.mxu0 0.0
  %93 = vmatpush1.msra.mxu0 %v42
  %94 = vmatprep.subr.mxu0 0.0
  %95 = vmatpush1.msra.mxu0 %v41
  %96 = vmatprep.subr.mxu0 0.0
  %97 = vmatpush2.msra.mxu0 0.0
  %98 = vmatprep.subr.mxu0 0.0
  %99 = vmatpush2.msra.mxu0 0.0
  %100 = vmatprep.subr.mxu0 0.0
  %101 = vmatpush2.msra.mxu0 0.0
  %102 = vmatprep.subr.mxu0 0.0
  %103 = vmatpush2.msra.mxu0 0.0
  %104 = vmatprep.subr.mxu0 0.0
  %105 = vmatpush2.msra.mxu0 0.0
  %106 = vmatprep.subr.mxu0 0.0
  %107 = vmatpush2.msra.mxu0 0.0
  %108 = vmatprep.subr.mxu0 0.0
  %109 = vmatpush2.msra.mxu0 0.0
  %110 = vmatprep.subr.mxu0 0.0
  %111 = vmatpush2.msra.mxu0 0.0
  %112 = vmatprep.subr.mxu0 0.0
  %113 = vmatpush2.msra.mxu0 0.0
  %114 = vmatprep.subr.mxu0 0.0
  %115 = vmatpush2.msra.mxu0 0.0
  %116 = vmatprep.subr.mxu0 0.0
  %117 = vmatpush2.msra.mxu0 0.0
  %118 = vmatprep.subr.mxu0 0.0
  %119 = vmatpush2.msra.mxu0 0.0
  %120 = vmatprep.subr.mxu0 0.0
  %121 = vmatpush2.msra.mxu0 0.0
  %122 = vmatprep.subr.mxu0 0.0
  %123 = vmatpush2.msra.mxu0 0.0
  %124 = vmatprep.subr.mxu0 0.0
  %125 = vmatpush2.msra.mxu0 0.0
  %126 = vmatprep.subr.mxu0 0.0
  %127 = vmatpush2.msra.mxu0 0.0
  %128 = vmatprep.mubr.f32.mxu0 0.0
  %129 = vmatmul.mubr.f32.gmra.mxu0 %v40
  %v130 = vpop.f32.mrf.mxu0
  %v131 = vadd.f32 %v62, %v130
  %v132 = vpop.f32.mrf.mxu0
  %133 = vdwg.mxu0
  %v134 = vmax.f32 %v131, 0.0
  %135 = vst.msk [vmem:[%s4] sm:$0xff] %vm37, %v134
  // Predicated region
  $region18: #{_reduce_state_forward_arrays.1} parent=0 // pred_check
    _
  $region19: #{_reduce_state_forward_arrays.1} parent=0 // pred_check_branch
    %137 = sbr.rel (0) target = $region21
  $region20: #{_reduce_state_forward_arrays.1} parent=0 // pred_region
    _
  $region21: #{_reduce_state_forward_arrays.1} parent=0 // pred_fallthru
    _
  // Predicated region
  $region22: #{_reduce_state_forward_arrays.1} parent=0 // pred_check
    _
  $region23: #{_reduce_state_forward_arrays.1} parent=0 // pred_check_branch
    %139 = sbr.rel (0) target = $region25
  $region24: #{_reduce_state_forward_arrays.1} parent=0 // pred_region
    _
  $region25: #{_reduce_state_forward_arrays.1} parent=0 // pred_fallthru
    _

</llo_original>
